<compile_context>
chip_gen: v7x
topology: tpu7x:2x2x1
jax: 0.10.0
libtpu: 0.0.40
codegen_flags: <defaults>
</compile_context>

<pallas_src>
import jax
import jax.numpy as jnp
from jax.experimental import pallas as pl
from jax.experimental.pallas import tpu as pltpu


def _round_up(x, m):
    return ((x + m - 1) // m) * m


# ----------------------------------------------------------------------------
# Kernel
# ----------------------------------------------------------------------------
def make_content_model_kernel(img_p, txt_p, hid_p, joint_p, out_pad):
    """Build the fused forward kernel with static (padded) sizes closed over."""
    # Row offsets into the stacked embedder weight slab.  Every block is padded
    # to a multiple of 16 rows, so all slices below are tile-aligned views.
    o_img = 0
    o_txt = img_p
    o_h1 = img_p + txt_p
    o_h2 = o_h1 + hid_p
    o_h3 = o_h2 + hid_p
    # Lane offsets into the packed bias row.
    ob_emb_out = 4 * hid_p                      # embedder output bias (joint_p)
    ob_head_h = ob_emb_out + joint_p            # head hidden-layer biases (3*hid_p)
    ob_head_o = ob_head_h + 3 * hid_p           # padded head output biases (out_pad)

    def kernel(img_ref, txt_ref, ew03_ref, ew4_ref, hw0_ref, hw1_ref, b_ref, out_ref):
        f32 = jnp.float32
        bf16 = jnp.bfloat16

        img = img_ref[...]
        txt = txt_ref[...]
        # text[text != text] = 0 ; image[image != image] = 0  (NaN -> 0).
        # If the caller already provides bf16 activations, the astype is a no-op.
        img = jnp.where(img != img, 0.0, img).astype(bf16)
        txt = jnp.where(txt != txt, 0.0, txt).astype(bf16)

        def dot32(a, w):
            return jnp.dot(a, w, preferred_element_type=f32)

        # --- Joint content embedder -------------------------------------
        # Layer 0: concat eliminated -> two dots summed in the f32 accumulator.
        h = (dot32(img, ew03_ref[o_img:o_img + img_p, :])
             + dot32(txt, ew03_ref[o_txt:o_txt + txt_p, :])
             + b_ref[:, 0:hid_p])
        h = jnp.maximum(h, 0.0).astype(bf16)
        # Hidden layers 1..3 (static, tile-aligned slices of one slab).
        h = jnp.maximum(dot32(h, ew03_ref[o_h1:o_h1 + hid_p, :])
                        + b_ref[:, hid_p:2 * hid_p], 0.0).astype(bf16)
        h = jnp.maximum(dot32(h, ew03_ref[o_h2:o_h2 + hid_p, :])
                        + b_ref[:, 2 * hid_p:3 * hid_p], 0.0).astype(bf16)
        h = jnp.maximum(dot32(h, ew03_ref[o_h3:o_h3 + hid_p, :])
                        + b_ref[:, 3 * hid_p:4 * hid_p], 0.0).astype(bf16)
        # Embedder output layer (no ReLU).
        embed = (dot32(h, ew4_ref[...])
                 + b_ref[:, ob_emb_out:ob_emb_out + joint_p]).astype(bf16)

        # --- Fused prediction heads --------------------------------------
        # One (J, 3H) matmul + ReLU for all three head hidden layers.
        hh = jnp.maximum(dot32(embed, hw0_ref[...])
                         + b_ref[:, ob_head_h:ob_head_h + 3 * hid_p], 0.0).astype(bf16)
        # Block-diagonal zero-padded final weight: single lane-dense output
        # (lanes 0/1/2 = tree/max/avg, rest exact zeros).  bf16 writeback.
        out = dot32(hh, hw1_ref[...]) + b_ref[:, ob_head_o:ob_head_o + out_pad]
        out_ref[...] = out.astype(out_ref.dtype)

    return kernel


# ----------------------------------------------------------------------------
# Parameters (original per-layer structure) + host-side packing
# ----------------------------------------------------------------------------
def init_params(key, image_embed_size, text_embed_size, hidden_size, joint_size):
    """Deterministic synthetic parameters, in the original per-layer layout."""
    def lin(k, din, dout):
        kw, kb = jax.random.split(k)
        w = jax.random.normal(kw, (din, dout), jnp.float32) * (din ** -0.5)
        b = jax.random.normal(kb, (1, dout), jnp.float32) * 0.01
        return w, b

    keys = jax.random.split(key, 11)
    din = image_embed_size + text_embed_size
    embedder = [lin(keys[0], din, hidden_size)]
    for i in range(1, 4):
        embedder.append(lin(keys[i], hidden_size, hidden_size))
    embedder.append(lin(keys[4], hidden_size, joint_size))

    params = {"embedder": embedder}
    for j, name in enumerate(("tree", "max_depth", "avg_depth")):
        params[name] = [lin(keys[5 + 2 * j], joint_size, hidden_size),
                        lin(keys[6 + 2 * j], hidden_size, 1)]
    return params


def pack_params(params, image_embed_size, text_embed_size, out_pad=128):
    """Host-side restructuring: pad every block to 16-row/lane multiples, stack
    weights into a handful of slabs, build the block-diagonal head weight, pack
    all tiny biases into one lane row, cast weights to bf16."""
    bf16 = jnp.bfloat16
    emb = params["embedder"]
    heads = [params["tree"], params["max_depth"], params["avg_depth"]]
    hidden = emb[1][0].shape[0]
    joint = emb[4][0].shape[1]
    assert emb[0][0].shape[0] == image_embed_size + text_embed_size

    ROW = 16  # bf16 sublane tile: keeps every in-kernel slice a zero-cost view
    img_p = _round_up(image_embed_size, ROW)
    txt_p = _round_up(text_embed_size, ROW)
    hid_p = _round_up(hidden, ROW)
    joint_p = _round_up(joint, ROW)

    def pad2(w, rows, cols):
        return jnp.pad(w, ((0, rows - w.shape[0]), (0, cols - w.shape[1])))

    # Embedder weight slab (img rows | txt rows | 3 hidden blocks), each padded.
    w0_img = emb[0][0][:image_embed_size, :]
    w0_txt = emb[0][0][image_embed_size:, :]
    blocks = [pad2(w0_img, img_p, hid_p), pad2(w0_txt, txt_p, hid_p)]
    for i in range(1, 4):
        blocks.append(pad2(emb[i][0], hid_p, hid_p))
    ew03 = jnp.concatenate(blocks, axis=0).astype(bf16)
    ew4 = pad2(emb[4][0], hid_p, joint_p).astype(bf16)

    # Fused head hidden layer: (joint_p, 3*hid_p).
    hw0 = jnp.concatenate([pad2(h[0][0], joint_p, hid_p) for h in heads],
                          axis=1).astype(bf16)

    # Block-diagonal, zero-padded final head weight: (3*hid_p, out_pad).
    hw1 = jnp.zeros((3 * hid_p, out_pad), jnp.float32)
    hb1 = jnp.zeros((1, out_pad), jnp.float32)
    for k, h in enumerate(heads):
        hw1 = hw1.at[k * hid_p:k * hid_p + hidden, k].set(h[1][0][:, 0])
        hb1 = hb1.at[0, k].set(h[1][1][0, 0])
    hw1 = hw1.astype(bf16)

    # Single packed bias row:
    #   eb0..eb3 (4*hid_p) | eb4 (joint_p) | head hidden (3*hid_p) | head out (out_pad)
    biases = jnp.concatenate(
        [pad2(emb[i][1], 1, hid_p) for i in range(4)]
        + [pad2(emb[4][1], 1, joint_p)]
        + [pad2(h[0][1], 1, hid_p) for h in heads]
        + [hb1], axis=1).astype(jnp.float32)

    return dict(ew03=ew03, ew4=ew4, hw0=hw0, hw1=hw1, biases=biases,
                img_p=img_p, txt_p=txt_p, hid_p=hid_p, joint_p=joint_p,
                out_pad=out_pad)


# ----------------------------------------------------------------------------
# Wrapper
# ----------------------------------------------------------------------------
def _choose_batch_tile(batch):
    """Large tiles to amortize ~0.35us/step overhead, but >=2 grid steps when
    the batch allows so both v7x TensorCores get work."""
    ROW = 16        # bf16 sublane tile (avoids relayouts for bf16 activations)
    MAX_TB = 1024   # < ~5 MiB per-step activations even for f32 inputs
    if batch <= ROW:
        return _round_up(max(batch, 1), 8)          # tiny batch: single step
    return min(MAX_TB, _round_up(-(-batch // 2), ROW))


def content_model_forward(image, text, packed):
    B = image.shape[0]
    img_p, txt_p = packed["img_p"], packed["txt_p"]
    hid_p, joint_p, out_pad = packed["hid_p"], packed["joint_p"], packed["out_pad"]

    tb = _choose_batch_tile(B)
    Bp = _round_up(B, tb)
    grid = (Bp // tb,)

    # Host-side zero padding (batch rows to the tile, feature lanes to the
    # padded weight-block widths).  NaN scrub + zero weight rows keep it inert.
    def pad_act(x, feat_p):
        pr, pc = Bp - x.shape[0], feat_p - x.shape[1]
        return jnp.pad(x, ((0, pr), (0, pc))) if (pr or pc) else x

    image_p = pad_act(image, img_p)   # dtype preserved: pass bf16 to halve DMA
    text_p = pad_act(text, txt_p)

    kernel = make_content_model_kernel(img_p, txt_p, hid_p, joint_p, out_pad)

    def const_spec(arr):
        # Whole array resident in VMEM; constant block index -> no re-DMA per step.
        return pl.BlockSpec(arr.shape, lambda i: (0,) * arr.ndim)

    in_specs = [
        pl.BlockSpec((tb, img_p), lambda i: (i, 0)),
        pl.BlockSpec((tb, txt_p), lambda i: (i, 0)),
        const_spec(packed["ew03"]),
        const_spec(packed["ew4"]),
        const_spec(packed["hw0"]),
        const_spec(packed["hw1"]),
        const_spec(packed["biases"]),
    ]
    out_specs = pl.BlockSpec((tb, out_pad), lambda i: (i, 0))

    args = (image_p, text_p, packed["ew03"], packed["ew4"],
            packed["hw0"], packed["hw1"], packed["biases"])

    # Explicit VMEM budget (conservatively assume double-buffering everywhere)
    # so a future hidden/joint scale-up fails loudly instead of silently
    # regressing on v7x (64 MiB physical / 32 MiB default scoped VMEM).
    weight_bytes = sum(int(packed[k].size) * packed[k].dtype.itemsize
                       for k in ("ew03", "ew4", "hw0", "hw1", "biases"))
    act_bytes = tb * (img_p * image_p.dtype.itemsize + txt_p * text_p.dtype.itemsize)
    out_bytes = tb * out_pad * 2  # bf16 writeback
    vmem_est = 2 * (act_bytes + out_bytes + weight_bytes) + (2 << 20)
    assert vmem_est <= (48 << 20), (
        f"VMEM estimate {vmem_est >> 20} MiB exceeds the v7x budget; reduce the "
        "batch tile or hidden/joint sizes")
    vmem_limit = min(max(vmem_est, 16 << 20), 64 << 20)

    flops = 2 * Bp * ((img_p + txt_p) * hid_p + 3 * hid_p * hid_p
                      + hid_p * joint_p + joint_p * 3 * hid_p
                      + 3 * hid_p * out_pad)
    bytes_accessed = (sum(int(a.size) * a.dtype.itemsize for a in args)
                      + Bp * out_pad * 2)

    out = pl.pallas_call(
        kernel,
        out_shape=jax.ShapeDtypeStruct((Bp, out_pad), jnp.bfloat16),
        grid=grid,
        in_specs=in_specs,
        out_specs=out_specs,
        compiler_params=pltpu.CompilerParams(
            dimension_semantics=("parallel",),
            vmem_limit_bytes=vmem_limit),
        cost_estimate=pl.CostEstimate(flops=flops, transcendentals=0,
                                      bytes_accessed=bytes_accessed),
    )(*args)

    # Lane-dense (Bp, 128) bf16 output -> three (B, 1) f32 results (lanes 0/1/2).
    f32 = jnp.float32
    return (out[:B, 0:1].astype(f32),
            out[:B, 1:2].astype(f32),
            out[:B, 2:3].astype(f32))


# ----------------------------------------------------------------------------
# Pure-JAX reference (original per-head structure, same bf16 weight quantization)
# ----------------------------------------------------------------------------
def reference_forward(image, text, params):
    bf16 = jnp.bfloat16
    f32 = jnp.float32
    emb = params["embedder"]
    heads = [params["tree"], params["max_depth"], params["avg_depth"]]

    img = jnp.where(image != image, 0.0, image).astype(bf16)
    txt = jnp.where(text != text, 0.0, text).astype(bf16)
    h = jnp.concatenate([img, txt], axis=-1)
    for i in range(4):
        W, b = emb[i]
        h = jnp.maximum(jnp.dot(h, W.astype(bf16), preferred_element_type=f32) + b,
                        0.0).astype(bf16)
    W, b = emb[4]
    embed = (jnp.dot(h, W.astype(bf16), preferred_element_type=f32) + b).astype(bf16)

    outs = []
    for (W0, b0), (w1, b1) in heads:
        hh = jnp.maximum(jnp.dot(embed, W0.astype(bf16), preferred_element_type=f32) + b0,
                         0.0).astype(bf16)
        outs.append(jnp.dot(hh, w1.astype(bf16), preferred_element_type=f32) + b1)
    return tuple(outs)


if __name__ == "__main__":
    IMAGE_EMBED = 64
    TEXT_EMBED = 64
    HIDDEN = 128
    JOINT = 128

    key = jax.random.PRNGKey(0)
    k_img, k_txt, k_params, k_img2, k_txt2 = jax.random.split(key, 5)
    params = init_params(k_params, IMAGE_EMBED, TEXT_EMBED, HIDDEN, JOINT)
    packed = pack_params(params, IMAGE_EMBED, TEXT_EMBED)

    # Tolerance covers the documented bf16 weight + bf16-output quantization.
    ATOL, RTOL = 2e-3, 1e-2

    # --- Test 1: small f32 batch with NaNs (matches the PyTorch spec path) ---
    B = 8
    image = jax.random.normal(k_img, (B, IMAGE_EMBED), jnp.float32)
    text = jax.random.normal(k_txt, (B, TEXT_EMBED), jnp.float32)
    image = image.at[0, 3].set(jnp.nan)
    text = text.at[1, 7].set(jnp.nan)

    results = content_model_forward(image, text, packed)
    jax.block_until_ready(results)
    ref = reference_forward(image, text, params)
    for got, want in zip(results, ref):
        assert got.shape == (B, 1)
        assert bool(jnp.all(jnp.isfinite(got)))
        assert jnp.allclose(got, want, atol=ATOL, rtol=RTOL)

    # --- Test 2: larger, non-tile-multiple bf16 batch (padded, 2 grid steps) --
    B2 = 200
    image2 = jax.random.normal(k_img2, (B2, IMAGE_EMBED), jnp.float32).astype(jnp.bfloat16)
    text2 = jax.random.normal(k_txt2, (B2, TEXT_EMBED), jnp.float32).astype(jnp.bfloat16)
    image2 = image2.at[5, 0].set(jnp.nan)

    results2 = content_model_forward(image2, text2, packed)
    jax.block_until_ready(results2)
    ref2 = reference_forward(image2, text2, params)
    for got, want in zip(results2, ref2):
        assert got.shape == (B2, 1)
        assert bool(jnp.all(jnp.isfinite(got)))
        assert jnp.allclose(got, want, atol=ATOL, rtol=RTOL)

    print("KERNEL_OK")
</pallas_src>

<mosaic_0001>
module attributes {stable_mosaic.version = 11 : i64} {
  func.func @kernel(%arg0: i32, %arg1: memref<8x64xf32, #tpu.memory_space<vmem>>, %arg2: memref<8x64xf32, #tpu.memory_space<vmem>>, %arg3: memref<512x128xbf16, #tpu.memory_space<vmem>>, %arg4: memref<128x128xbf16, #tpu.memory_space<vmem>>, %arg5: memref<128x384xbf16, #tpu.memory_space<vmem>>, %arg6: memref<384x128xbf16, #tpu.memory_space<vmem>>, %arg7: memref<1x1152xf32, #tpu.memory_space<vmem>>, %arg8: memref<8x128xbf16, #tpu.memory_space<vmem>>) attributes {dimension_semantics = [#tpu.dimension_semantics<parallel>], iteration_bounds = array<i64: 1>, scalar_prefetch = 0 : i64, scratch_operands = 0 : i64, tpu.core_type = #tpu.core_type<tc>, window_params = [{transform_indices = @transform_0, window_bounds = array<i64: 8, 64>}, {transform_indices = @transform_1, window_bounds = array<i64: 8, 64>}, {pipeline_mode = #tpu.pipeline_mode<synchronous>, transform_indices = @transform_2, window_bounds = array<i64: 512, 128>}, {pipeline_mode = #tpu.pipeline_mode<synchronous>, transform_indices = @transform_3, window_bounds = array<i64: 128, 128>}, {pipeline_mode = #tpu.pipeline_mode<synchronous>, transform_indices = @transform_4, window_bounds = array<i64: 128, 384>}, {pipeline_mode = #tpu.pipeline_mode<synchronous>, transform_indices = @transform_5, window_bounds = array<i64: 384, 128>}, {pipeline_mode = #tpu.pipeline_mode<synchronous>, transform_indices = @transform_6, window_bounds = array<i64: 1, 1152>}, {transform_indices = @transform_7, window_bounds = array<i64: 8, 128>}]} {
    %c0 = arith.constant 0 : index
    %c0_0 = arith.constant 0 : index
    %0 = vector.load %arg1[%c0, %c0_0] : memref<8x64xf32, #tpu.memory_space<vmem>>, vector<8x64xf32>
    %c0_1 = arith.constant 0 : index
    %c0_2 = arith.constant 0 : index
    %1 = vector.load %arg2[%c0_1, %c0_2] : memref<8x64xf32, #tpu.memory_space<vmem>>, vector<8x64xf32>
    %2 = arith.cmpf one, %0, %0 : vector<8x64xf32>
    %cst = arith.constant 0.000000e+00 : f32
    %3 = vector.broadcast %cst : f32 to vector<8x64xf32>
    %4 = arith.select %2, %3, %0 : vector<8x64xi1>, vector<8x64xf32>
    %5 = arith.truncf %4 : vector<8x64xf32> to vector<8x64xbf16>
    %6 = arith.cmpf one, %1, %1 : vector<8x64xf32>
    %cst_3 = arith.constant 0.000000e+00 : f32
    %7 = vector.broadcast %cst_3 : f32 to vector<8x64xf32>
    %8 = arith.select %6, %7, %1 : vector<8x64xi1>, vector<8x64xf32>
    %9 = arith.truncf %8 : vector<8x64xf32> to vector<8x64xbf16>
    %c0_4 = arith.constant 0 : index
    %c0_5 = arith.constant 0 : index
    %10 = vector.load %arg3[%c0_4, %c0_5] : memref<512x128xbf16, #tpu.memory_space<vmem>>, vector<64x128xbf16>
    %cst_6 = arith.constant dense<0.000000e+00> : vector<8x128xf32>
    %11 = tpu.matmul %5, %10, %cst_6 {dimension_numbers = #tpu.dot_dimension_numbers<[1], [0], [0], [1], [0, 0, 1, 1], [], []>} : vector<8x64xbf16>, vector<64x128xbf16>, vector<8x128xf32> -> vector<8x128xf32>
    %c64 = arith.constant 64 : index
    %c0_7 = arith.constant 0 : index
    %12 = vector.load %arg3[%c64, %c0_7] : memref<512x128xbf16, #tpu.memory_space<vmem>>, vector<64x128xbf16>
    %cst_8 = arith.constant dense<0.000000e+00> : vector<8x128xf32>
    %13 = tpu.matmul %9, %12, %cst_8 {dimension_numbers = #tpu.dot_dimension_numbers<[1], [0], [0], [1], [0, 0, 1, 1], [], []>} : vector<8x64xbf16>, vector<64x128xbf16>, vector<8x128xf32> -> vector<8x128xf32>
    %14 = arith.addf %11, %13 : vector<8x128xf32>
    %c0_9 = arith.constant 0 : index
    %c0_10 = arith.constant 0 : index
    %15 = vector.load %arg7[%c0_9, %c0_10] : memref<1x1152xf32, #tpu.memory_space<vmem>>, vector<1x128xf32>
    %16 = vector.broadcast %15 : vector<1x128xf32> to vector<8x128xf32>
    %17 = arith.addf %14, %16 : vector<8x128xf32>
    %cst_11 = arith.constant 0.000000e+00 : f32
    %18 = vector.broadcast %cst_11 : f32 to vector<8x128xf32>
    %19 = arith.maximumf %17, %18 : vector<8x128xf32>
    %20 = arith.truncf %19 : vector<8x128xf32> to vector<8x128xbf16>
    %c128 = arith.constant 128 : index
    %c0_12 = arith.constant 0 : index
    %21 = vector.load %arg3[%c128, %c0_12] : memref<512x128xbf16, #tpu.memory_space<vmem>>, vector<128x128xbf16>
    %cst_13 = arith.constant dense<0.000000e+00> : vector<8x128xf32>
    %22 = tpu.matmul %20, %21, %cst_13 {dimension_numbers = #tpu.dot_dimension_numbers<[1], [0], [0], [1], [0, 0, 1, 1], [], []>} : vector<8x128xbf16>, vector<128x128xbf16>, vector<8x128xf32> -> vector<8x128xf32>
    %c0_14 = arith.constant 0 : index
    %c128_15 = arith.constant 128 : index
    %23 = vector.load %arg7[%c0_14, %c128_15] : memref<1x1152xf32, #tpu.memory_space<vmem>>, vector<1x128xf32>
    %24 = vector.broadcast %23 : vector<1x128xf32> to vector<8x128xf32>
    %25 = arith.addf %22, %24 : vector<8x128xf32>
    %cst_16 = arith.constant 0.000000e+00 : f32
    %26 = vector.broadcast %cst_16 : f32 to vector<8x128xf32>
    %27 = arith.maximumf %25, %26 : vector<8x128xf32>
    %28 = arith.truncf %27 : vector<8x128xf32> to vector<8x128xbf16>
    %c256 = arith.constant 256 : index
    %c0_17 = arith.constant 0 : index
    %29 = vector.load %arg3[%c256, %c0_17] : memref<512x128xbf16, #tpu.memory_space<vmem>>, vector<128x128xbf16>
    %cst_18 = arith.constant dense<0.000000e+00> : vector<8x128xf32>
    %30 = tpu.matmul %28, %29, %cst_18 {dimension_numbers = #tpu.dot_dimension_numbers<[1], [0], [0], [1], [0, 0, 1, 1], [], []>} : vector<8x128xbf16>, vector<128x128xbf16>, vector<8x128xf32> -> vector<8x128xf32>
    %c0_19 = arith.constant 0 : index
    %c256_20 = arith.constant 256 : index
    %31 = vector.load %arg7[%c0_19, %c256_20] : memref<1x1152xf32, #tpu.memory_space<vmem>>, vector<1x128xf32>
    %32 = vector.broadcast %31 : vector<1x128xf32> to vector<8x128xf32>
    %33 = arith.addf %30, %32 : vector<8x128xf32>
    %cst_21 = arith.constant 0.000000e+00 : f32
    %34 = vector.broadcast %cst_21 : f32 to vector<8x128xf32>
    %35 = arith.maximumf %33, %34 : vector<8x128xf32>
    %36 = arith.truncf %35 : vector<8x128xf32> to vector<8x128xbf16>
    %c384 = arith.constant 384 : index
    %c0_22 = arith.constant 0 : index
    %37 = vector.load %arg3[%c384, %c0_22] : memref<512x128xbf16, #tpu.memory_space<vmem>>, vector<128x128xbf16>
    %cst_23 = arith.constant dense<0.000000e+00> : vector<8x128xf32>
    %38 = tpu.matmul %36, %37, %cst_23 {dimension_numbers = #tpu.dot_dimension_numbers<[1], [0], [0], [1], [0, 0, 1, 1], [], []>} : vector<8x128xbf16>, vector<128x128xbf16>, vector<8x128xf32> -> vector<8x128xf32>
    %c0_24 = arith.constant 0 : index
    %c384_25 = arith.constant 384 : index
    %39 = vector.load %arg7[%c0_24, %c384_25] : memref<1x1152xf32, #tpu.memory_space<vmem>>, vector<1x128xf32>
    %40 = vector.broadcast %39 : vector<1x128xf32> to vector<8x128xf32>
    %41 = arith.addf %38, %40 : vector<8x128xf32>
    %cst_26 = arith.constant 0.000000e+00 : f32
    %42 = vector.broadcast %cst_26 : f32 to vector<8x128xf32>
    %43 = arith.maximumf %41, %42 : vector<8x128xf32>
    %44 = arith.truncf %43 : vector<8x128xf32> to vector<8x128xbf16>
    %c0_27 = arith.constant 0 : index
    %c0_28 = arith.constant 0 : index
    %45 = vector.load %arg4[%c0_27, %c0_28] : memref<128x128xbf16, #tpu.memory_space<vmem>>, vector<128x128xbf16>
    %cst_29 = arith.constant dense<0.000000e+00> : vector<8x128xf32>
    %46 = tpu.matmul %44, %45, %cst_29 {dimension_numbers = #tpu.dot_dimension_numbers<[1], [0], [0], [1], [0, 0, 1, 1], [], []>} : vector<8x128xbf16>, vector<128x128xbf16>, vector<8x128xf32> -> vector<8x128xf32>
    %c0_30 = arith.constant 0 : index
    %c512 = arith.constant 512 : index
    %47 = vector.load %arg7[%c0_30, %c512] : memref<1x1152xf32, #tpu.memory_space<vmem>>, vector<1x128xf32>
    %48 = vector.broadcast %47 : vector<1x128xf32> to vector<8x128xf32>
    %49 = arith.addf %46, %48 : vector<8x128xf32>
    %50 = arith.truncf %49 : vector<8x128xf32> to vector<8x128xbf16>
    %c0_31 = arith.constant 0 : index
    %c0_32 = arith.constant 0 : index
    %51 = vector.load %arg5[%c0_31, %c0_32] : memref<128x384xbf16, #tpu.memory_space<vmem>>, vector<128x384xbf16>
    %cst_33 = arith.constant dense<0.000000e+00> : vector<8x384xf32>
    %52 = tpu.matmul %50, %51, %cst_33 {dimension_numbers = #tpu.dot_dimension_numbers<[1], [0], [0], [1], [0, 0, 1, 1], [], []>} : vector<8x128xbf16>, vector<128x384xbf16>, vector<8x384xf32> -> vector<8x384xf32>
    %c0_34 = arith.constant 0 : index
    %c640 = arith.constant 640 : index
    %53 = vector.load %arg7[%c0_34, %c640] : memref<1x1152xf32, #tpu.memory_space<vmem>>, vector<1x384xf32>
    %54 = vector.broadcast %53 : vector<1x384xf32> to vector<8x384xf32>
    %55 = arith.addf %52, %54 : vector<8x384xf32>
    %cst_35 = arith.constant 0.000000e+00 : f32
    %56 = vector.broadcast %cst_35 : f32 to vector<8x384xf32>
    %57 = arith.maximumf %55, %56 : vector<8x384xf32>
    %58 = arith.truncf %57 : vector<8x384xf32> to vector<8x384xbf16>
    %c0_36 = arith.constant 0 : index
    %c0_37 = arith.constant 0 : index
    %59 = vector.load %arg6[%c0_36, %c0_37] : memref<384x128xbf16, #tpu.memory_space<vmem>>, vector<384x128xbf16>
    %cst_38 = arith.constant dense<0.000000e+00> : vector<8x128xf32>
    %60 = tpu.matmul %58, %59, %cst_38 {dimension_numbers = #tpu.dot_dimension_numbers<[1], [0], [0], [1], [0, 0, 1, 1], [], []>} : vector<8x384xbf16>, vector<384x128xbf16>, vector<8x128xf32> -> vector<8x128xf32>
    %c0_39 = arith.constant 0 : index
    %c1024 = arith.constant 1024 : index
    %61 = vector.load %arg7[%c0_39, %c1024] : memref<1x1152xf32, #tpu.memory_space<vmem>>, vector<1x128xf32>
    %62 = vector.broadcast %61 : vector<1x128xf32> to vector<8x128xf32>
    %63 = arith.addf %60, %62 : vector<8x128xf32>
    %64 = arith.truncf %63 : vector<8x128xf32> to vector<8x128xbf16>
    %c0_40 = arith.constant 0 : index
    %c0_41 = arith.constant 0 : index
    %65 = vector.load %arg8[%c0_40, %c0_41] : memref<8x128xbf16, #tpu.memory_space<vmem>>, vector<8x128xbf16>
    tpu.vector_store %arg8[%c0_40, %c0_41], %64 {strides = array<i32>} : memref<8x128xbf16, #tpu.memory_space<vmem>>, vector<8x128xbf16>,
    return
  }
  func.func @transform_0(%arg0: i32) -> (i32, i32) {
    %c0_i32 = arith.constant 0 : i32
    %c0_i32_0 = arith.constant 0 : i32
    return %arg0, %c0_i32 : i32, i32
  }
  func.func @transform_1(%arg0: i32) -> (i32, i32) {
    %c0_i32 = arith.constant 0 : i32
    %c0_i32_0 = arith.constant 0 : i32
    return %arg0, %c0_i32 : i32, i32
  }
  func.func @transform_2(%arg0: i32) -> (i32, i32) {
    %c0_i32 = arith.constant 0 : i32
    %c0_i32_0 = arith.constant 0 : i32
    %c0_i32_1 = arith.constant 0 : i32
    return %c0_i32, %c0_i32_0 : i32, i32
  }
  func.func @transform_3(%arg0: i32) -> (i32, i32) {
    %c0_i32 = arith.constant 0 : i32
    %c0_i32_0 = arith.constant 0 : i32
    %c0_i32_1 = arith.constant 0 : i32
    return %c0_i32, %c0_i32_0 : i32, i32
  }
  func.func @transform_4(%arg0: i32) -> (i32, i32) {
    %c0_i32 = arith.constant 0 : i32
    %c0_i32_0 = arith.constant 0 : i32
    %c0_i32_1 = arith.constant 0 : i32
    return %c0_i32, %c0_i32_0 : i32, i32
  }
  func.func @transform_5(%arg0: i32) -> (i32, i32) {
    %c0_i32 = arith.constant 0 : i32
    %c0_i32_0 = arith.constant 0 : i32
    %c0_i32_1 = arith.constant 0 : i32
    return %c0_i32, %c0_i32_0 : i32, i32
  }
  func.func @transform_6(%arg0: i32) -> (i32, i32) {
    %c0_i32 = arith.constant 0 : i32
    %c0_i32_0 = arith.constant 0 : i32
    %c0_i32_1 = arith.constant 0 : i32
    return %c0_i32, %c0_i32_0 : i32, i32
  }
  func.func @transform_7(%arg0: i32) -> (i32, i32) {
    %c0_i32 = arith.constant 0 : i32
    %c0_i32_0 = arith.constant 0 : i32
    return %arg0, %c0_i32 : i32, i32
  }
}

</mosaic_0001>

<llo_original>
// kernel: tpu_custom_call.1
$region0: #{tpu_custom_call.1}
  #allocation0 [shape = 'u32[]', space=smem, size = 0x4, offset = 0x4, fixed_abs, tag = 'smem constant byte address 0x4 - core index']
  #allocation1 [shape = 'u32[144,128]{1,0:T(1,128)}', space=vmem, size = 0x12000, scoped, tag = 'internal scratch']
  %s0 = inlined_call_operand.hbm [shape: f32[8,64], index: 0, kind: input, shape index: {}]
  %s1 = inlined_call_operand.hbm [shape: f32[8,64], index: 1, kind: input, shape index: {}]
  %s2 = inlined_call_operand.hbm [shape: bf16[512,128], index: 2, kind: input, shape index: {}]
  %s3 = inlined_call_operand.hbm [shape: bf16[128,128], index: 3, kind: input, shape index: {}]
  %s4 = inlined_call_operand.hbm [shape: bf16[128,384], index: 4, kind: input, shape index: {}]
  %s5 = inlined_call_operand.hbm [shape: bf16[384,128], index: 5, kind: input, shape index: {}]
  %s6 = inlined_call_operand.vmem [shape: f32[1,1152], index: 6, kind: input, shape index: {}]
  %s7 = inlined_call_operand.hbm [shape: bf16[8,128], index: 7, kind: output, shape index: {}]
  %s8 = sld [smem:[#allocation0]]
  $region62: #{tpu_custom_call.1} parent=0
    _
  %s10 = ssub.s32 1, %s8
  %s11 = scalar_select 0, %s10, %s8
  $region1: #{tpu_custom_call.1} parent=0
    #allocation2 [shape = 'u8[4096]{0}', space=vmem, size = 0x1000, scoped, tag = 'input window, operand 0, single buffered']
    #allocation3 [shape = 's32[1]{0}', space=sflag, size = 0x4, scoped, tag = 'scoped memory for tpu_custom_call.1']
    #allocation4 [shape = 's32[1]{0}', space=sflag, size = 0x4, scoped, tag = 'scoped memory for tpu_custom_call.1']
    #allocation5 [shape = 'u8[4096]{0}', space=vmem, size = 0x1000, scoped, tag = 'input window, operand 1, single buffered']
    #allocation6 [shape = 's32[1]{0}', space=sflag, size = 0x4, scoped, tag = 'scoped memory for tpu_custom_call.1']
    #allocation7 [shape = 'u8[131072]{0}', space=vmem, size = 0x20000, scoped, tag = 'input window, operand 2, single buffered']
    #allocation8 [shape = 'u8[32768]{0}', space=vmem, size = 0x8000, scoped, tag = 'input window, operand 3, single buffered']
    #allocation9 [shape = 's32[1]{0}', space=sflag, size = 0x4, scoped, tag = 'scoped memory for tpu_custom_call.1']
    #allocation10 [shape = 'u8[98304]{0}', space=vmem, size = 0x18000, scoped, tag = 'input window, operand 4, single buffered']
    #allocation11 [shape = 'u8[98304]{0}', space=vmem, size = 0x18000, scoped, tag = 'input window, operand 5, single buffered']
    #allocation12 [shape = 's32[1]{0}', space=sflag, size = 0x4, scoped, tag = 'scoped memory for tpu_custom_call.1']
    #allocation13 [shape = 'u8[2048]{0}', space=vmem, size = 0x800, scoped, tag = 'output window, operand 0, single buffered']
    %12 = vsyncpa [#allocation3], 0
    %13 = vsyncpa [#allocation6], 0
    %14 = vsyncpa [#allocation9], 0
    %15 = vsyncpa [#allocation12], 0
    %16 = vsyncpa [#allocation4], 0
    // Predicated region
    $region2: #{tpu_custom_call.1} parent=1 // pred_check
      _
    $region3: #{tpu_custom_call.1} parent=1 // pred_check_branch
      %18 = sbr.rel (0) target = $region5
    $region4: #{tpu_custom_call.1} parent=1 // pred_region
      %s20 = ssub.s32 128, 128
      %21 = vsyncadd [#allocation3], %s20
      %s23 = sshll.u32 [#allocation2], 4
      %s24 = int_to_ptr.vmem [resolvable:$true] %s23
      %26 = dma.hbm_to_vmem [thread:$0]  %s0, 128, %s24, [#allocation3]
    $region5: #{tpu_custom_call.1} parent=1 // pred_fallthru
      _
    // Predicated region
    $region6: #{tpu_custom_call.1} parent=1 // pred_check
      _
    $region7: #{tpu_custom_call.1} parent=1 // pred_check_branch
      %28 = sbr.rel (0) target = $region9
    $region8: #{tpu_custom_call.1} parent=1 // pred_region
      %s30 = ssub.s32 128, 128
      %31 = vsyncadd [#allocation6], %s30
      %s33 = sshll.u32 [#allocation5], 4
      %s34 = int_to_ptr.vmem [resolvable:$true] %s33
      %36 = dma.hbm_to_vmem [thread:$0]  %s1, 128, %s34, [#allocation6]
    $region9: #{tpu_custom_call.1} parent=1 // pred_fallthru
      _
    // Predicated region
    $region10: #{tpu_custom_call.1} parent=1 // pred_check
      _
    $region11: #{tpu_custom_call.1} parent=1 // pred_check_branch
      %38 = sbr.rel (0) target = $region13
    $region12: #{tpu_custom_call.1} parent=1 // pred_region
      %s40 = ssub.s32 4096, 4096
      %41 = vsyncadd [#allocation6], %s40
      %s42 = sshll.u32 [#allocation7], 4
      %s43 = int_to_ptr.vmem [resolvable:$true] %s42
      %48 = dma.hbm_to_vmem [thread:$0]  %s2, 4096, %s43, [#allocation6], 64, 64, 4
    $region13: #{tpu_custom_call.1} parent=1 // pred_fallthru
      _
    // Predicated region
    $region14: #{tpu_custom_call.1} parent=1 // pred_check
      _
    $region15: #{tpu_custom_call.1} parent=1 // pred_check_branch
      %50 = sbr.rel (0) target = $region17
    $region16: #{tpu_custom_call.1} parent=1 // pred_region
      %s52 = ssub.s32 1024, 1024
      %53 = vsyncadd [#allocation9], %s52
      %s54 = sshll.u32 [#allocation8], 4
      %s55 = int_to_ptr.vmem [resolvable:$true] %s54
      %60 = dma.hbm_to_vmem [thread:$0]  %s3, 1024, %s55, [#allocation9], 64, 64, 4
    $region17: #{tpu_custom_call.1} parent=1 // pred_fallthru
      _
    // Predicated region
    $region18: #{tpu_custom_call.1} parent=1 // pred_check
      _
    $region19: #{tpu_custom_call.1} parent=1 // pred_check_branch
      %62 = sbr.rel (0) target = $region21
    $region20: #{tpu_custom_call.1} parent=1 // pred_region
      %s64 = ssub.s32 3072, 3072
      %65 = vsyncadd [#allocation9], %s64
      %s66 = sshll.u32 [#allocation10], 4
      %s67 = int_to_ptr.vmem [resolvable:$true] %s66
      %72 = dma.hbm_to_vmem [thread:$0]  %s4, 3072, %s67, [#allocation9], 192, 192, 12
    $region21: #{tpu_custom_call.1} parent=1 // pred_fallthru
      _
    // Predicated region
    $region22: #{tpu_custom_call.1} parent=1 // pred_check
      _
    $region23: #{tpu_custom_call.1} parent=1 // pred_check_branch
      %74 = sbr.rel (0) target = $region25
    $region24: #{tpu_custom_call.1} parent=1 // pred_region
      %s76 = ssub.s32 3072, 3072
      %77 = vsyncadd [#allocation12], %s76
      %s78 = sshll.u32 [#allocation11], 4
      %s79 = int_to_ptr.vmem [resolvable:$true] %s78
      %84 = dma.hbm_to_vmem [thread:$0]  %s5, 3072, %s79, [#allocation12], 64, 64, 4
    $region25: #{tpu_custom_call.1} parent=1 // pred_fallthru
      _
    // Predicated region
    $region26: #{tpu_custom_call.1} parent=1 // pred_check
      _
    $region27: #{tpu_custom_call.1} parent=1 // pred_check_branch
      %86 = sbr.rel (0) target = $region29
    $region28: #{tpu_custom_call.1} parent=1 // pred_region
      _
    $region29: #{tpu_custom_call.1} parent=1 // pred_fallthru
      _
    // Predicated region
    $region30: #{tpu_custom_call.1} parent=1 // pred_check
      _
    $region31: #{tpu_custom_call.1} parent=1 // pred_check_branch
      %88 = sbr.rel (0) target = $region33
    $region32: #{tpu_custom_call.1} parent=1 // pred_region
      %89 = dma.done [#allocation3], 128
    $region33: #{tpu_custom_call.1} parent=1 // pred_fallthru
      _
    // Predicated region
    $region34: #{tpu_custom_call.1} parent=1 // pred_check
      _
    $region35: #{tpu_custom_call.1} parent=1 // pred_check_branch
      %91 = sbr.rel (0) target = $region37
    $region36: #{tpu_custom_call.1} parent=1 // pred_region
      %92 = dma.done [#allocation6], 128
    $region37: #{tpu_custom_call.1} parent=1 // pred_fallthru
      _
    // Predicated region
    $region38: #{tpu_custom_call.1} parent=1 // pred_check
      _
    $region39: #{tpu_custom_call.1} parent=1 // pred_check_branch
      %94 = sbr.rel (0) target = $region41
    $region40: #{tpu_custom_call.1} parent=1 // pred_region
      %95 = dma.done [#allocation6], 4096
    $region41: #{tpu_custom_call.1} parent=1 // pred_fallthru
      _
    // Predicated region
    $region42: #{tpu_custom_call.1} parent=1 // pred_check
      _
    $region43: #{tpu_custom_call.1} parent=1 // pred_check_branch
      %97 = sbr.rel (0) target = $region45
    $region44: #{tpu_custom_call.1} parent=1 // pred_region
      %98 = dma.done [#allocation9], 1024
    $region45: #{tpu_custom_call.1} parent=1 // pred_fallthru
      _
    // Predicated region
    $region46: #{tpu_custom_call.1} parent=1 // pred_check
      _
    $region47: #{tpu_custom_call.1} parent=1 // pred_check_branch
      %100 = sbr.rel (0) target = $region49
    $region48: #{tpu_custom_call.1} parent=1 // pred_region
      %101 = dma.done [#allocation9], 3072
    $region49: #{tpu_custom_call.1} parent=1 // pred_fallthru
      _
    // Predicated region
    $region50: #{tpu_custom_call.1} parent=1 // pred_check
      _
    $region51: #{tpu_custom_call.1} parent=1 // pred_check_branch
      %103 = sbr.rel (0) target = $region53
    $region52: #{tpu_custom_call.1} parent=1 // pred_region
      %104 = dma.done [#allocation12], 3072
    $region53: #{tpu_custom_call.1} parent=1 // pred_fallthru
      _
    %v106 = vld [vmem:[#allocation2] sm:$0xff]
    %v107 = vld [vmem:[#allocation5] sm:$0xff]
    %vm108 = vcmp.ne.f32.partialorder %v106, %v106
    %v109 = vsel %vm108, 0.0, %v106
    %v110 = vpack.c.bf16 %v109, %v109
    %vm111 = vcmp.ne.f32.partialorder %v107, %v107
    %v112 = vsel %vm111, 0.0, %v107
    %v113 = vpack.c.bf16 %v112, %v112
    %v114 = vld [vmem:[#allocation7] sm:$0xf]
    %v115 = vld [vmem:[#allocation7 + $0x4] sm:$0xf]
    %v116 = vld [vmem:[#allocation7 + $0x8] sm:$0xf]
    %v117 = vld [vmem:[#allocation7 + $0xc] sm:$0xf]
    %v118 = vld [vmem:[#allocation7 + $0x10] sm:$0xf]
    %v119 = vld [vmem:[#allocation7 + $0x14] sm:$0xf]
    %v120 = vld [vmem:[#allocation7 + $0x18] sm:$0xf]
    %v121 = vld [vmem:[#allocation7 + $0x1c] sm:$0xf]
    %v122 = vld [vmem:[#allocation7 + $0x20] sm:$0xf]
    %v123 = vld [vmem:[#allocation7 + $0x24] sm:$0xf]
    %v124 = vld [vmem:[#allocation7 + $0x28] sm:$0xf]
    %v125 = vld [vmem:[#allocation7 + $0x2c] sm:$0xf]
    %v126 = vld [vmem:[#allocation7 + $0x30] sm:$0xf]
    %v127 = vld [vmem:[#allocation7 + $0x34] sm:$0xf]
    %v128 = vld [vmem:[#allocation7 + $0x38] sm:$0xf]
    %v129 = vld [vmem:[#allocation7 + $0x3c] sm:$0xf]
    %v138 = vunpack.c.l.b16 %v122
    %v139 = vunpack.c.l.b16 %v123
    %v140 = vunpack.c.l.b16 %v124
    %v141 = vunpack.c.l.b16 %v125
    %v142 = vunpack.c.l.b16 %v126
    %v143 = vunpack.c.l.b16 %v127
    %v144 = vunpack.c.l.b16 %v128
    %v145 = vunpack.c.l.b16 %v129
    %v146 = vpack.c.b16 %v139, %v138
    %v147 = vpack.c.b16 %v141, %v140
    %v148 = vpack.c.b16 %v143, %v142
    %v149 = vpack.c.b16 %v145, %v144
    %vm154 = vcmask 523264
    %v156 = vsel %vm154, %v113, 0
    %158 = vmatprep.subr.bf16.mxu0 0
    %159 = vmatpush1.bf16.msra.mxu0 %v146
    %160 = vmatprep.subr.bf16.mxu0 0
    %161 = vmatpush1.bf16.msra.mxu0 %v147
    %162 = vmatprep.subr.bf16.mxu0 0
    %163 = vmatpush1.bf16.msra.mxu0 %v148
    %164 = vmatprep.subr.bf16.mxu0 0
    %165 = vmatpush1.bf16.msra.mxu0 %v149
    %166 = vmatprep.subr.bf16.mxu0 0
    %167 = vmatpush1.bf16.msra.mxu0 0
    %168 = vmatprep.subr.bf16.mxu0 0
    %169 = vmatpush1.bf16.msra.mxu0 0
    %170 = vmatprep.subr.bf16.mxu0 0
    %171 = vmatpush1.bf16.msra.mxu0 0
    %172 = vmatprep.subr.bf16.mxu0 0
    %173 = vmatpush1.bf16.msra.mxu0 0
    %174 = vmatprep.subr.bf16.mxu0 0
    %175 = vmatpush1.bf16.msra.mxu0 0
    %176 = vmatprep.subr.bf16.mxu0 0
    %177 = vmatpush1.bf16.msra.mxu0 0
    %178 = vmatprep.subr.bf16.mxu0 0
    %179 = vmatpush1.bf16.msra.mxu0 0
    %180 = vmatprep.subr.bf16.mxu0 0
    %181 = vmatpush1.bf16.msra.mxu0 0
    %182 = vmatprep.subr.bf16.mxu0 0
    %183 = vmatpush1.bf16.msra.mxu0 0
    %184 = vmatprep.subr.bf16.mxu0 0
    %185 = vmatpush1.bf16.msra.mxu0 0
    %186 = vmatprep.subr.bf16.mxu0 0
    %187 = vmatpush1.bf16.msra.mxu0 0
    %188 = vmatprep.subr.bf16.mxu0 0
    %189 = vmatpush1.bf16.msra.mxu0 0
    %190 = vmatprep.mubr.bf16.mxu0 0
    %191 = vmatmul.mubr.bf16.gmra.mrb[0].mxu0 %v156
    %v192 = vpop.f32.mrb[0].mxu0
    %v193 = vadd.f32 0.0, %v192
    %v194 = vpop.f32.mrb[0].mxu0
    %v195 = vpop.f32.mrb[0].mxu0
    %v196 = vpop.f32.mrb[0].mxu0
    %197 = vdwg.mxu0
    %v206 = vunpack.c.l.b16 %v114
    %v207 = vunpack.c.l.b16 %v115
    %v208 = vunpack.c.l.b16 %v116
    %v209 = vunpack.c.l.b16 %v117
    %v210 = vunpack.c.l.b16 %v118
    %v211 = vunpack.c.l.b16 %v119
    %v212 = vunpack.c.l.b16 %v120
    %v213 = vunpack.c.l.b16 %v121
    %v214 = vpack.c.b16 %v207, %v206
    %v215 = vpack.c.b16 %v209, %v208
    %v216 = vpack.c.b16 %v211, %v210
    %v217 = vpack.c.b16 %v213, %v212
    %v223 = vsel %vm154, %v110, 0
    %225 = vmatprep.subr.bf16.mxu0 0
    %226 = vmatpush1.bf16.msra.mxu0 %v214
    %227 = vmatprep.subr.bf16.mxu0 0
    %228 = vmatpush1.bf16.msra.mxu0 %v215
    %229 = vmatprep.subr.bf16.mxu0 0
    %230 = vmatpush1.bf16.msra.mxu0 %v216
    %231 = vmatprep.subr.bf16.mxu0 0
    %232 = vmatpush1.bf16.msra.mxu0 %v217
    %233 = vmatprep.subr.bf16.mxu0 0
    %234 = vmatpush1.bf16.msra.mxu0 0
    %235 = vmatprep.subr.bf16.mxu0 0
    %236 = vmatpush1.bf16.msra.mxu0 0
    %237 = vmatprep.subr.bf16.mxu0 0
    %238 = vmatpush1.bf16.msra.mxu0 0
    %239 = vmatprep.subr.bf16.mxu0 0
    %240 = vmatpush1.bf16.msra.mxu0 0
    %241 = vmatprep.subr.bf16.mxu0 0
    %242 = vmatpush1.bf16.msra.mxu0 0
    %243 = vmatprep.subr.bf16.mxu0 0
    %244 = vmatpush1.bf16.msra.mxu0 0
    %245 = vmatprep.subr.bf16.mxu0 0
    %246 = vmatpush1.bf16.msra.mxu0 0
    %247 = vmatprep.subr.bf16.mxu0 0
    %248 = vmatpush1.bf16.msra.mxu0 0
    %249 = vmatprep.subr.bf16.mxu0 0
    %250 = vmatpush1.bf16.msra.mxu0 0
    %251 = vmatprep.subr.bf16.mxu0 0
    %252 = vmatpush1.bf16.msra.mxu0 0
    %253 = vmatprep.subr.bf16.mxu0 0
    %254 = vmatpush1.bf16.msra.mxu0 0
    %255 = vmatprep.subr.bf16.mxu0 0
    %256 = vmatpush1.bf16.msra.mxu0 0
    %257 = vmatprep.mubr.bf16.mxu0 0
    %258 = vmatmul.mubr.bf16.gmra.mrb[0].mxu0 %v223
    %v259 = vpop.f32.mrb[0].mxu0
    %v260 = vadd.f32 %v193, %v259
    %v261 = vpop.f32.mrb[0].mxu0
    %v262 = vpop.f32.mrb[0].mxu0
    %v263 = vpop.f32.mrb[0].mxu0
    %264 = vdwg.mxu0
    %v265 = vld [vmem:[%s6] sm:$0x1]
    %v267 = vlaneseq
    %v268 = vshrl.u32 %v267, 7
    %v269 = vsub.s32 0, %v268
    %v270 = vrot.slane %v265, %v269
    %v272 = vadd.f32 %v260, %v270
    %v273 = vmax.f32 %v272, 0.0
    %v274 = vpack.c.bf16 %v273, %v273
    %v275 = vld [vmem:[#allocation7 + $0x40] sm:$0xf]
    %v276 = vld [vmem:[#allocation7 + $0x44] sm:$0xf]
    %v277 = vld [vmem:[#allocation7 + $0x48] sm:$0xf]
    %v278 = vld [vmem:[#allocation7 + $0x4c] sm:$0xf]
    %v279 = vld [vmem:[#allocation7 + $0x50] sm:$0xf]
    %v280 = vld [vmem:[#allocation7 + $0x54] sm:$0xf]
    %v281 = vld [vmem:[#allocation7 + $0x58] sm:$0xf]
    %v282 = vld [vmem:[#allocation7 + $0x5c] sm:$0xf]
    %v283 = vld [vmem:[#allocation7 + $0x60] sm:$0xf]
    %v284 = vld [vmem:[#allocation7 + $0x64] sm:$0xf]
    %v285 = vld [vmem:[#allocation7 + $0x68] sm:$0xf]
    %v286 = vld [vmem:[#allocation7 + $0x6c] sm:$0xf]
    %v287 = vld [vmem:[#allocation7 + $0x70] sm:$0xf]
    %v288 = vld [vmem:[#allocation7 + $0x74] sm:$0xf]
    %v289 = vld [vmem:[#allocation7 + $0x78] sm:$0xf]
    %v290 = vld [vmem:[#allocation7 + $0x7c] sm:$0xf]
    %v291 = vld [vmem:[%s6 + $0x1] sm:$0x1]
    %v293 = vlaneseq
    %v294 = vshrl.u32 %v293, 7
    %v295 = vsub.s32 0, %v294
    %v296 = vrot.slane %v291, %v295
    %v314 = vunpack.c.l.b16 %v275
    %v315 = vunpack.c.l.b16 %v276
    %v316 = vunpack.c.l.b16 %v277
    %v317 = vunpack.c.l.b16 %v278
    %v318 = vunpack.c.l.b16 %v279
    %v319 = vunpack.c.l.b16 %v280
    %v320 = vunpack.c.l.b16 %v281
    %v321 = vunpack.c.l.b16 %v282
    %v322 = vunpack.c.l.b16 %v283
    %v323 = vunpack.c.l.b16 %v284
    %v324 = vunpack.c.l.b16 %v285
    %v325 = vunpack.c.l.b16 %v286
    %v326 = vunpack.c.l.b16 %v287
    %v327 = vunpack.c.l.b16 %v288
    %v328 = vunpack.c.l.b16 %v289
    %v329 = vunpack.c.l.b16 %v290
    %v330 = vpack.c.b16 %v315, %v314
    %v331 = vpack.c.b16 %v317, %v316
    %v332 = vpack.c.b16 %v319, %v318
    %v333 = vpack.c.b16 %v321, %v320
    %v334 = vpack.c.b16 %v323, %v322
    %v335 = vpack.c.b16 %v325, %v324
    %v336 = vpack.c.b16 %v327, %v326
    %v337 = vpack.c.b16 %v329, %v328
    %346 = vmatprep.subr.bf16.mxu0 0
    %347 = vmatpush1.bf16.msra.mxu0 %v330
    %348 = vmatprep.subr.bf16.mxu0 0
    %349 = vmatpush1.bf16.msra.mxu0 %v331
    %350 = vmatprep.subr.bf16.mxu0 0
    %351 = vmatpush1.bf16.msra.mxu0 %v332
    %352 = vmatprep.subr.bf16.mxu0 0
    %353 = vmatpush1.bf16.msra.mxu0 %v333
    %354 = vmatprep.subr.bf16.mxu0 0
    %355 = vmatpush1.bf16.msra.mxu0 %v334
    %356 = vmatprep.subr.bf16.mxu0 0
    %357 = vmatpush1.bf16.msra.mxu0 %v335
    %358 = vmatprep.subr.bf16.mxu0 0
    %359 = vmatpush1.bf16.msra.mxu0 %v336
    %360 = vmatprep.subr.bf16.mxu0 0
    %361 = vmatpush1.bf16.msra.mxu0 %v337
    %362 = vmatprep.subr.bf16.mxu0 0
    %363 = vmatpush1.bf16.msra.mxu0 0
    %364 = vmatprep.subr.bf16.mxu0 0
    %365 = vmatpush1.bf16.msra.mxu0 0
    %366 = vmatprep.subr.bf16.mxu0 0
    %367 = vmatpush1.bf16.msra.mxu0 0
    %368 = vmatprep.subr.bf16.mxu0 0
    %369 = vmatpush1.bf16.msra.mxu0 0
    %370 = vmatprep.subr.bf16.mxu0 0
    %371 = vmatpush1.bf16.msra.mxu0 0
    %372 = vmatprep.subr.bf16.mxu0 0
    %373 = vmatpush1.bf16.msra.mxu0 0
    %374 = vmatprep.subr.bf16.mxu0 0
    %375 = vmatpush1.bf16.msra.mxu0 0
    %376 = vmatprep.subr.bf16.mxu0 0
    %377 = vmatpush1.bf16.msra.mxu0 0
    %378 = vmatprep.mubr.bf16.mxu0 0
    %379 = vmatmul.mubr.bf16.gmra.mrb[0].mxu0 %v274
    %v380 = vpop.f32.mrb[0].mxu0
    %v381 = vadd.f32 %v296, %v380
    %v382 = vpop.f32.mrb[0].mxu0
    %v383 = vpop.f32.mrb[0].mxu0
    %v384 = vpop.f32.mrb[0].mxu0
    %385 = vdwg.mxu0
    %v386 = vmax.f32 %v381, 0.0
    %v387 = vpack.c.bf16 %v386, %v386
    %v388 = vld [vmem:[#allocation7 + $0x80] sm:$0xf]
    %v389 = vld [vmem:[#allocation7 + $0x84] sm:$0xf]
    %v390 = vld [vmem:[#allocation7 + $0x88] sm:$0xf]
    %v391 = vld [vmem:[#allocation7 + $0x8c] sm:$0xf]
    %v392 = vld [vmem:[#allocation7 + $0x90] sm:$0xf]
    %v393 = vld [vmem:[#allocation7 + $0x94] sm:$0xf]
    %v394 = vld [vmem:[#allocation7 + $0x98] sm:$0xf]
    %v395 = vld [vmem:[#allocation7 + $0x9c] sm:$0xf]
    %v396 = vld [vmem:[#allocation7 + $0xa0] sm:$0xf]
    %v397 = vld [vmem:[#allocation7 + $0xa4] sm:$0xf]
    %v398 = vld [vmem:[#allocation7 + $0xa8] sm:$0xf]
    %v399 = vld [vmem:[#allocation7 + $0xac] sm:$0xf]
    %v400 = vld [vmem:[#allocation7 + $0xb0] sm:$0xf]
    %v401 = vld [vmem:[#allocation7 + $0xb4] sm:$0xf]
    %v402 = vld [vmem:[#allocation7 + $0xb8] sm:$0xf]
    %v403 = vld [vmem:[#allocation7 + $0xbc] sm:$0xf]
    %v404 = vld [vmem:[%s6 + $0x2] sm:$0x1]
    %v406 = vlaneseq
    %v407 = vshrl.u32 %v406, 7
    %v408 = vsub.s32 0, %v407
    %v409 = vrot.slane %v404, %v408
    %v427 = vunpack.c.l.b16 %v388
    %v428 = vunpack.c.l.b16 %v389
    %v429 = vunpack.c.l.b16 %v390
    %v430 = vunpack.c.l.b16 %v391
    %v431 = vunpack.c.l.b16 %v392
    %v432 = vunpack.c.l.b16 %v393
    %v433 = vunpack.c.l.b16 %v394
    %v434 = vunpack.c.l.b16 %v395
    %v435 = vunpack.c.l.b16 %v396
    %v436 = vunpack.c.l.b16 %v397
    %v437 = vunpack.c.l.b16 %v398
    %v438 = vunpack.c.l.b16 %v399
    %v439 = vunpack.c.l.b16 %v400
    %v440 = vunpack.c.l.b16 %v401
    %v441 = vunpack.c.l.b16 %v402
    %v442 = vunpack.c.l.b16 %v403
    %v443 = vpack.c.b16 %v428, %v427
    %v444 = vpack.c.b16 %v430, %v429
    %v445 = vpack.c.b16 %v432, %v431
    %v446 = vpack.c.b16 %v434, %v433
    %v447 = vpack.c.b16 %v436, %v435
    %v448 = vpack.c.b16 %v438, %v437
    %v449 = vpack.c.b16 %v440, %v439
    %v450 = vpack.c.b16 %v442, %v441
    %459 = vmatprep.subr.bf16.mxu0 0
    %460 = vmatpush1.bf16.msra.mxu0 %v443
    %461 = vmatprep.subr.bf16.mxu0 0
    %462 = vmatpush1.bf16.msra.mxu0 %v444
    %463 = vmatprep.subr.bf16.mxu0 0
    %464 = vmatpush1.bf16.msra.mxu0 %v445
    %465 = vmatprep.subr.bf16.mxu0 0
    %466 = vmatpush1.bf16.msra.mxu0 %v446
    %467 = vmatprep.subr.bf16.mxu0 0
    %468 = vmatpush1.bf16.msra.mxu0 %v447
    %469 = vmatprep.subr.bf16.mxu0 0
    %470 = vmatpush1.bf16.msra.mxu0 %v448
    %471 = vmatprep.subr.bf16.mxu0 0
    %472 = vmatpush1.bf16.msra.mxu0 %v449
    %473 = vmatprep.subr.bf16.mxu0 0
    %474 = vmatpush1.bf16.msra.mxu0 %v450
    %475 = vmatprep.subr.bf16.mxu0 0
    %476 = vmatpush1.bf16.msra.mxu0 0
    %477 = vmatprep.subr.bf16.mxu0 0
    %478 = vmatpush1.bf16.msra.mxu0 0
    %479 = vmatprep.subr.bf16.mxu0 0
    %480 = vmatpush1.bf16.msra.mxu0 0
    %481 = vmatprep.subr.bf16.mxu0 0
    %482 = vmatpush1.bf16.msra.mxu0 0
    %483 = vmatprep.subr.bf16.mxu0 0
    %484 = vmatpush1.bf16.msra.mxu0 0
    %485 = vmatprep.subr.bf16.mxu0 0
    %486 = vmatpush1.bf16.msra.mxu0 0
    %487 = vmatprep.subr.bf16.mxu0 0
    %488 = vmatpush1.bf16.msra.mxu0 0
    %489 = vmatprep.subr.bf16.mxu0 0
    %490 = vmatpush1.bf16.msra.mxu0 0
    %491 = vmatprep.mubr.bf16.mxu0 0
    %492 = vmatmul.mubr.bf16.gmra.mrb[0].mxu0 %v387
    %v493 = vpop.f32.mrb[0].mxu0
    %v494 = vadd.f32 %v409, %v493
    %v495 = vpop.f32.mrb[0].mxu0
    %v496 = vpop.f32.mrb[0].mxu0
    %v497 = vpop.f32.mrb[0].mxu0
    %498 = vdwg.mxu0
    %v499 = vmax.f32 %v494, 0.0
    %v500 = vpack.c.bf16 %v499, %v499
    %v501 = vld [vmem:[#allocation7 + $0xc0] sm:$0xf]
    %v502 = vld [vmem:[#allocation7 + $0xc4] sm:$0xf]
    %v503 = vld [vmem:[#allocation7 + $0xc8] sm:$0xf]
    %v504 = vld [vmem:[#allocation7 + $0xcc] sm:$0xf]
    %v505 = vld [vmem:[#allocation7 + $0xd0] sm:$0xf]
    %v506 = vld [vmem:[#allocation7 + $0xd4] sm:$0xf]
    %v507 = vld [vmem:[#allocation7 + $0xd8] sm:$0xf]
    %v508 = vld [vmem:[#allocation7 + $0xdc] sm:$0xf]
    %v509 = vld [vmem:[#allocation7 + $0xe0] sm:$0xf]
    %v510 = vld [vmem:[#allocation7 + $0xe4] sm:$0xf]
    %v511 = vld [vmem:[#allocation7 + $0xe8] sm:$0xf]
    %v512 = vld [vmem:[#allocation7 + $0xec] sm:$0xf]
    %v513 = vld [vmem:[#allocation7 + $0xf0] sm:$0xf]
    %v514 = vld [vmem:[#allocation7 + $0xf4] sm:$0xf]
    %v515 = vld [vmem:[#allocation7 + $0xf8] sm:$0xf]
    %v516 = vld [vmem:[#allocation7 + $0xfc] sm:$0xf]
    %v517 = vld [vmem:[%s6 + $0x3] sm:$0x1]
    %v519 = vlaneseq
    %v520 = vshrl.u32 %v519, 7
    %v521 = vsub.s32 0, %v520
    %v522 = vrot.slane %v517, %v521
    %v540 = vunpack.c.l.b16 %v501
    %v541 = vunpack.c.l.b16 %v502
    %v542 = vunpack.c.l.b16 %v503
    %v543 = vunpack.c.l.b16 %v504
    %v544 = vunpack.c.l.b16 %v505
    %v545 = vunpack.c.l.b16 %v506
    %v546 = vunpack.c.l.b16 %v507
    %v547 = vunpack.c.l.b16 %v508
    %v548 = vunpack.c.l.b16 %v509
    %v549 = vunpack.c.l.b16 %v510
    %v550 = vunpack.c.l.b16 %v511
    %v551 = vunpack.c.l.b16 %v512
    %v552 = vunpack.c.l.b16 %v513
    %v553 = vunpack.c.l.b16 %v514
    %v554 = vunpack.c.l.b16 %v515
    %v555 = vunpack.c.l.b16 %v516
    %v556 = vpack.c.b16 %v541, %v540
    %v557 = vpack.c.b16 %v543, %v542
    %v558 = vpack.c.b16 %v545, %v544
    %v559 = vpack.c.b16 %v547, %v546
    %v560 = vpack.c.b16 %v549, %v548
    %v561 = vpack.c.b16 %v551, %v550
    %v562 = vpack.c.b16 %v553, %v552
    %v563 = vpack.c.b16 %v555, %v554
    %572 = vmatprep.subr.bf16.mxu0 0
    %573 = vmatpush1.bf16.msra.mxu0 %v556
    %574 = vmatprep.subr.bf16.mxu0 0
    %575 = vmatpush1.bf16.msra.mxu0 %v557
    %576 = vmatprep.subr.bf16.mxu0 0
    %577 = vmatpush1.bf16.msra.mxu0 %v558
    %578 = vmatprep.subr.bf16.mxu0 0
    %579 = vmatpush1.bf16.msra.mxu0 %v559
    %580 = vmatprep.subr.bf16.mxu0 0
    %581 = vmatpush1.bf16.msra.mxu0 %v560
    %582 = vmatprep.subr.bf16.mxu0 0
    %583 = vmatpush1.bf16.msra.mxu0 %v561
    %584 = vmatprep.subr.bf16.mxu0 0
    %585 = vmatpush1.bf16.msra.mxu0 %v562
    %586 = vmatprep.subr.bf16.mxu0 0
    %587 = vmatpush1.bf16.msra.mxu0 %v563
    %588 = vmatprep.subr.bf16.mxu0 0
    %589 = vmatpush1.bf16.msra.mxu0 0
    %590 = vmatprep.subr.bf16.mxu0 0
    %591 = vmatpush1.bf16.msra.mxu0 0
    %592 = vmatprep.subr.bf16.mxu0 0
    %593 = vmatpush1.bf16.msra.mxu0 0
    %594 = vmatprep.subr.bf16.mxu0 0
    %595 = vmatpush1.bf16.msra.mxu0 0
    %596 = vmatprep.subr.bf16.mxu0 0
    %597 = vmatpush1.bf16.msra.mxu0 0
    %598 = vmatprep.subr.bf16.mxu0 0
    %599 = vmatpush1.bf16.msra.mxu0 0
    %600 = vmatprep.subr.bf16.mxu0 0
    %601 = vmatpush1.bf16.msra.mxu0 0
    %602 = vmatprep.subr.bf16.mxu0 0
    %603 = vmatpush1.bf16.msra.mxu0 0
    %604 = vmatprep.mubr.bf16.mxu0 0
    %605 = vmatmul.mubr.bf16.gmra.mrb[0].mxu0 %v500
    %v606 = vpop.f32.mrb[0].mxu0
    %v607 = vadd.f32 %v522, %v606
    %v608 = vpop.f32.mrb[0].mxu0
    %v609 = vpop.f32.mrb[0].mxu0
    %v610 = vpop.f32.mrb[0].mxu0
    %611 = vdwg.mxu0
    %v612 = vmax.f32 %v607, 0.0
    %v613 = vpack.c.bf16 %v612, %v612
    %v614 = vld [vmem:[#allocation8] sm:$0xf]
    %v615 = vld [vmem:[#allocation8 + $0x4] sm:$0xf]
    %v616 = vld [vmem:[#allocation8 + $0x8] sm:$0xf]
    %v617 = vld [vmem:[#allocation8 + $0xc] sm:$0xf]
    %v618 = vld [vmem:[#allocation8 + $0x10] sm:$0xf]
    %v619 = vld [vmem:[#allocation8 + $0x14] sm:$0xf]
    %v620 = vld [vmem:[#allocation8 + $0x18] sm:$0xf]
    %v621 = vld [vmem:[#allocation8 + $0x1c] sm:$0xf]
    %v622 = vld [vmem:[#allocation8 + $0x20] sm:$0xf]
    %v623 = vld [vmem:[#allocation8 + $0x24] sm:$0xf]
    %v624 = vld [vmem:[#allocation8 + $0x28] sm:$0xf]
    %v625 = vld [vmem:[#allocation8 + $0x2c] sm:$0xf]
    %v626 = vld [vmem:[#allocation8 + $0x30] sm:$0xf]
    %v627 = vld [vmem:[#allocation8 + $0x34] sm:$0xf]
    %v628 = vld [vmem:[#allocation8 + $0x38] sm:$0xf]
    %v629 = vld [vmem:[#allocation8 + $0x3c] sm:$0xf]
    %v630 = vld [vmem:[%s6 + $0x4] sm:$0x1]
    %v632 = vlaneseq
    %v633 = vshrl.u32 %v632, 7
    %v634 = vsub.s32 0, %v633
    %v635 = vrot.slane %v630, %v634
    %v653 = vunpack.c.l.b16 %v614
    %v654 = vunpack.c.l.b16 %v615
    %v655 = vunpack.c.l.b16 %v616
    %v656 = vunpack.c.l.b16 %v617
    %v657 = vunpack.c.l.b16 %v618
    %v658 = vunpack.c.l.b16 %v619
    %v659 = vunpack.c.l.b16 %v620
    %v660 = vunpack.c.l.b16 %v621
    %v661 = vunpack.c.l.b16 %v622
    %v662 = vunpack.c.l.b16 %v623
    %v663 = vunpack.c.l.b16 %v624
    %v664 = vunpack.c.l.b16 %v625
    %v665 = vunpack.c.l.b16 %v626
    %v666 = vunpack.c.l.b16 %v627
    %v667 = vunpack.c.l.b16 %v628
    %v668 = vunpack.c.l.b16 %v629
    %v669 = vpack.c.b16 %v654, %v653
    %v670 = vpack.c.b16 %v656, %v655
    %v671 = vpack.c.b16 %v658, %v657
    %v672 = vpack.c.b16 %v660, %v659
    %v673 = vpack.c.b16 %v662, %v661
    %v674 = vpack.c.b16 %v664, %v663
    %v675 = vpack.c.b16 %v666, %v665
    %v676 = vpack.c.b16 %v668, %v667
    %685 = vmatprep.subr.bf16.mxu0 0
    %686 = vmatpush1.bf16.msra.mxu0 %v669
    %687 = vmatprep.subr.bf16.mxu0 0
    %688 = vmatpush1.bf16.msra.mxu0 %v670
    %689 = vmatprep.subr.bf16.mxu0 0
    %690 = vmatpush1.bf16.msra.mxu0 %v671
    %691 = vmatprep.subr.bf16.mxu0 0
    %692 = vmatpush1.bf16.msra.mxu0 %v672
    %693 = vmatprep.subr.bf16.mxu0 0
    %694 = vmatpush1.bf16.msra.mxu0 %v673
    %695 = vmatprep.subr.bf16.mxu0 0
    %696 = vmatpush1.bf16.msra.mxu0 %v674
    %697 = vmatprep.subr.bf16.mxu0 0
    %698 = vmatpush1.bf16.msra.mxu0 %v675
    %699 = vmatprep.subr.bf16.mxu0 0
    %700 = vmatpush1.bf16.msra.mxu0 %v676
    %701 = vmatprep.subr.bf16.mxu0 0
    %702 = vmatpush1.bf16.msra.mxu0 0
    %703 = vmatprep.subr.bf16.mxu0 0
    %704 = vmatpush1.bf16.msra.mxu0 0
    %705 = vmatprep.subr.bf16.mxu0 0
    %706 = vmatpush1.bf16.msra.mxu0 0
    %707 = vmatprep.subr.bf16.mxu0 0
    %708 = vmatpush1.bf16.msra.mxu0 0
    %709 = vmatprep.subr.bf16.mxu0 0
    %710 = vmatpush1.bf16.msra.mxu0 0
    %711 = vmatprep.subr.bf16.mxu0 0
    %712 = vmatpush1.bf16.msra.mxu0 0
    %713 = vmatprep.subr.bf16.mxu0 0
    %714 = vmatpush1.bf16.msra.mxu0 0
    %715 = vmatprep.subr.bf16.mxu0 0
    %716 = vmatpush1.bf16.msra.mxu0 0
    %717 = vmatprep.mubr.bf16.mxu0 0
    %718 = vmatmul.mubr.bf16.gmra.mrb[0].mxu0 %v613
    %v719 = vpop.f32.mrb[0].mxu0
    %v720 = vadd.f32 %v635, %v719
    %v721 = vpop.f32.mrb[0].mxu0
    %v722 = vpop.f32.mrb[0].mxu0
    %v723 = vpop.f32.mrb[0].mxu0
    %724 = vdwg.mxu0
    %v725 = vpack.c.bf16 %v720, %v720
    %v726 = vld [vmem:[#allocation10] sm:$0xff]
    %v727 = vld [vmem:[#allocation10 + $0x8] sm:$0xf]
    %v728 = vld [vmem:[#allocation10 + $0xc] sm:$0xff]
    %v729 = vld [vmem:[#allocation10 + $0x14] sm:$0xf]
    %v730 = vld [vmem:[#allocation10 + $0x18] sm:$0xff]
    %v731 = vld [vmem:[#allocation10 + $0x20] sm:$0xf]
    %v732 = vld [vmem:[#allocation10 + $0x24] sm:$0xff]
    %v733 = vld [vmem:[#allocation10 + $0x2c] sm:$0xf]
    %v734 = vld [vmem:[#allocation10 + $0x30] sm:$0xff]
    %v735 = vld [vmem:[#allocation10 + $0x38] sm:$0xf]
    %v736 = vld [vmem:[#allocation10 + $0x3c] sm:$0xff]
    %v737 = vld [vmem:[#allocation10 + $0x44] sm:$0xf]
    %v738 = vld [vmem:[#allocation10 + $0x48] sm:$0xff]
    %v739 = vld [vmem:[#allocation10 + $0x50] sm:$0xf]
    %v740 = vld [vmem:[#allocation10 + $0x54] sm:$0xff]
    %v741 = vld [vmem:[#allocation10 + $0x5c] sm:$0xf]
    %v742 = vld [vmem:[#allocation10 + $0x60] sm:$0xff]
    %v743 = vld [vmem:[#allocation10 + $0x68] sm:$0xf]
    %v744 = vld [vmem:[#allocation10 + $0x6c] sm:$0xff]
    %v745 = vld [vmem:[#allocation10 + $0x74] sm:$0xf]
    %v746 = vld [vmem:[#allocation10 + $0x78] sm:$0xff]
    %v747 = vld [vmem:[#allocation10 + $0x80] sm:$0xf]
    %v748 = vld [vmem:[#allocation10 + $0x84] sm:$0xff]
    %v749 = vld [vmem:[#allocation10 + $0x8c] sm:$0xf]
    %v750 = vld [vmem:[#allocation10 + $0x90] sm:$0xff]
    %v751 = vld [vmem:[#allocation10 + $0x98] sm:$0xf]
    %v752 = vld [vmem:[#allocation10 + $0x9c] sm:$0xff]
    %v753 = vld [vmem:[#allocation10 + $0xa4] sm:$0xf]
    %v754 = vld [vmem:[#allocation10 + $0xa8] sm:$0xff]
    %v755 = vld [vmem:[#allocation10 + $0xb0] sm:$0xf]
    %v756 = vld [vmem:[#allocation10 + $0xb4] sm:$0xff]
    %v757 = vld [vmem:[#allocation10 + $0xbc] sm:$0xf]
    %v758 = vld [vmem:[%s6 + $0x5] sm:$0x7]
    %v760 = vlaneseq
    %v761 = vshrl.u32 %v760, 7
    %v762 = vsub.s32 0, %v761
    %v763 = vrot.slane %v758, %v762
    %v764 = vlaneseq
    %v765 = vshrl.u32 %v764, 7
    %v766 = vsub.s32 1, %v765
    %v767 = vrot.slane %v758, %v766
    %v768 = vlaneseq
    %v769 = vshrl.u32 %v768, 7
    %v770 = vsub.s32 2, %v769
    %v771 = vrot.slane %v758, %v770
    %v807 = vunpack.c.l.b16 %v726
    %v808 = vunpack.c.h.b16 %v726
    %v809 = vunpack.c.l.b16 %v727
    %v810 = vunpack.c.l.b16 %v728
    %v811 = vunpack.c.h.b16 %v728
    %v812 = vunpack.c.l.b16 %v729
    %v813 = vunpack.c.l.b16 %v730
    %v814 = vunpack.c.h.b16 %v730
    %v815 = vunpack.c.l.b16 %v731
    %v816 = vunpack.c.l.b16 %v732
    %v817 = vunpack.c.h.b16 %v732
    %v818 = vunpack.c.l.b16 %v733
    %v819 = vunpack.c.l.b16 %v734
    %v820 = vunpack.c.h.b16 %v734
    %v821 = vunpack.c.l.b16 %v735
    %v822 = vunpack.c.l.b16 %v736
    %v823 = vunpack.c.h.b16 %v736
    %v824 = vunpack.c.l.b16 %v737
    %v825 = vunpack.c.l.b16 %v738
    %v826 = vunpack.c.h.b16 %v738
    %v827 = vunpack.c.l.b16 %v739
    %v828 = vunpack.c.l.b16 %v740
    %v829 = vunpack.c.h.b16 %v740
    %v830 = vunpack.c.l.b16 %v741
    %v831 = vunpack.c.l.b16 %v742
    %v832 = vunpack.c.h.b16 %v742
    %v833 = vunpack.c.l.b16 %v743
    %v834 = vunpack.c.l.b16 %v744
    %v835 = vunpack.c.h.b16 %v744
    %v836 = vunpack.c.l.b16 %v745
    %v837 = vunpack.c.l.b16 %v746
    %v838 = vunpack.c.h.b16 %v746
    %v839 = vunpack.c.l.b16 %v747
    %v840 = vunpack.c.l.b16 %v748
    %v841 = vunpack.c.h.b16 %v748
    %v842 = vunpack.c.l.b16 %v749
    %v843 = vunpack.c.l.b16 %v750
    %v844 = vunpack.c.h.b16 %v750
    %v845 = vunpack.c.l.b16 %v751
    %v846 = vunpack.c.l.b16 %v752
    %v847 = vunpack.c.h.b16 %v752
    %v848 = vunpack.c.l.b16 %v753
    %v849 = vunpack.c.l.b16 %v754
    %v850 = vunpack.c.h.b16 %v754
    %v851 = vunpack.c.l.b16 %v755
    %v852 = vunpack.c.l.b16 %v756
    %v853 = vunpack.c.h.b16 %v756
    %v854 = vunpack.c.l.b16 %v757
    %v855 = vpack.c.b16 %v810, %v807
    %v856 = vpack.c.b16 %v811, %v808
    %v857 = vpack.c.b16 %v812, %v809
    %v858 = vpack.c.b16 %v816, %v813
    %v859 = vpack.c.b16 %v817, %v814
    %v860 = vpack.c.b16 %v818, %v815
    %v861 = vpack.c.b16 %v822, %v819
    %v862 = vpack.c.b16 %v823, %v820
    %v863 = vpack.c.b16 %v824, %v821
    %v864 = vpack.c.b16 %v828, %v825
    %v865 = vpack.c.b16 %v829, %v826
    %v866 = vpack.c.b16 %v830, %v827
    %v867 = vpack.c.b16 %v834, %v831
    %v868 = vpack.c.b16 %v835, %v832
    %v869 = vpack.c.b16 %v836, %v833
    %v870 = vpack.c.b16 %v840, %v837
    %v871 = vpack.c.b16 %v841, %v838
    %v872 = vpack.c.b16 %v842, %v839
    %v873 = vpack.c.b16 %v846, %v843
    %v874 = vpack.c.b16 %v847, %v844
    %v875 = vpack.c.b16 %v848, %v845
    %v876 = vpack.c.b16 %v852, %v849
    %v877 = vpack.c.b16 %v853, %v850
    %v878 = vpack.c.b16 %v854, %v851
    %903 = vmatprep.subr.bf16.mxu0 %v856
    %904 = vmatpush1.bf16.msra.mxu0 %v855
    %905 = vmatprep.subr.bf16.mxu0 %v859
    %906 = vmatpush1.bf16.msra.mxu0 %v858
    %907 = vmatprep.subr.bf16.mxu0 %v862
    %908 = vmatpush1.bf16.msra.mxu0 %v861
    %909 = vmatprep.subr.bf16.mxu0 %v865
    %910 = vmatpush1.bf16.msra.mxu0 %v864
    %911 = vmatprep.subr.bf16.mxu0 %v868
    %912 = vmatpush1.bf16.msra.mxu0 %v867
    %913 = vmatprep.subr.bf16.mxu0 %v871
    %914 = vmatpush1.bf16.msra.mxu0 %v870
    %915 = vmatprep.subr.bf16.mxu0 %v874
    %916 = vmatpush1.bf16.msra.mxu0 %v873
    %917 = vmatprep.subr.bf16.mxu0 %v877
    %918 = vmatpush1.bf16.msra.mxu0 %v876
    %919 = vmatprep.subr.bf16.mxu0 0
    %920 = vmatpush1.bf16.msra.mxu0 0
    %921 = vmatprep.subr.bf16.mxu0 0
    %922 = vmatpush1.bf16.msra.mxu0 0
    %923 = vmatprep.subr.bf16.mxu0 0
    %924 = vmatpush1.bf16.msra.mxu0 0
    %925 = vmatprep.subr.bf16.mxu0 0
    %926 = vmatpush1.bf16.msra.mxu0 0
    %927 = vmatprep.subr.bf16.mxu0 0
    %928 = vmatpush1.bf16.msra.mxu0 0
    %929 = vmatprep.subr.bf16.mxu0 0
    %930 = vmatpush1.bf16.msra.mxu0 0
    %931 = vmatprep.subr.bf16.mxu0 0
    %932 = vmatpush1.bf16.msra.mxu0 0
    %933 = vmatprep.subr.bf16.mxu0 0
    %934 = vmatpush1.bf16.msra.mxu0 0
    %935 = vmatprep.mubr.bf16.mxu0 0
    %936 = vmatmul.mubr.bf16.gmra.mrb[0].mxu0 %v725
    %v937 = vpop.f32.mrb[0].mxu0
    %v938 = vadd.f32 %v763, %v937
    %v939 = vpop.f32.mrb[0].mxu0
    %v940 = vadd.f32 %v767, %v939
    %v941 = vpop.f32.mrb[0].mxu0
    %v942 = vpop.f32.mrb[0].mxu0
    %943 = vdwg.mxu0
    %944 = vmatprep.subr.bf16.mxu0 0
    %945 = vmatpush1.bf16.msra.mxu0 %v857
    %946 = vmatprep.subr.bf16.mxu0 0
    %947 = vmatpush1.bf16.msra.mxu0 %v860
    %948 = vmatprep.subr.bf16.mxu0 0
    %949 = vmatpush1.bf16.msra.mxu0 %v863
    %950 = vmatprep.subr.bf16.mxu0 0
    %951 = vmatpush1.bf16.msra.mxu0 %v866
    %952 = vmatprep.subr.bf16.mxu0 0
    %953 = vmatpush1.bf16.msra.mxu0 %v869
    %954 = vmatprep.subr.bf16.mxu0 0
    %955 = vmatpush1.bf16.msra.mxu0 %v872
    %956 = vmatprep.subr.bf16.mxu0 0
    %957 = vmatpush1.bf16.msra.mxu0 %v875
    %958 = vmatprep.subr.bf16.mxu0 0
    %959 = vmatpush1.bf16.msra.mxu0 %v878
    %960 = vmatprep.subr.bf16.mxu0 0
    %961 = vmatpush1.bf16.msra.mxu0 0
    %962 = vmatprep.subr.bf16.mxu0 0
    %963 = vmatpush1.bf16.msra.mxu0 0
    %964 = vmatprep.subr.bf16.mxu0 0
    %965 = vmatpush1.bf16.msra.mxu0 0
    %966 = vmatprep.subr.bf16.mxu0 0
    %967 = vmatpush1.bf16.msra.mxu0 0
    %968 = vmatprep.subr.bf16.mxu0 0
    %969 = vmatpush1.bf16.msra.mxu0 0
    %970 = vmatprep.subr.bf16.mxu0 0
    %971 = vmatpush1.bf16.msra.mxu0 0
    %972 = vmatprep.subr.bf16.mxu0 0
    %973 = vmatpush1.bf16.msra.mxu0 0
    %974 = vmatprep.subr.bf16.mxu0 0
    %975 = vmatpush1.bf16.msra.mxu0 0
    %976 = vmatprep.mubr.bf16.mxu0 0
    %977 = vmatmul.mubr.bf16.gmra.mrb[0].mxu0 %v725
    %v978 = vpop.f32.mrb[0].mxu0
    %v979 = vadd.f32 %v771, %v978
    %v980 = vpop.f32.mrb[0].mxu0
    %v981 = vpop.f32.mrb[0].mxu0
    %v982 = vpop.f32.mrb[0].mxu0
    %983 = vdwg.mxu0
    %v984 = vmax.f32 %v938, 0.0
    %v985 = vmax.f32 %v940, 0.0
    %v986 = vmax.f32 %v979, 0.0
    %v987 = vpack.c.bf16 %v984, %v984
    %v988 = vpack.c.bf16 %v985, %v985
    %v989 = vpack.c.bf16 %v986, %v986
    %v990 = vld [vmem:[#allocation11] sm:$0xf]
    %v991 = vld [vmem:[#allocation11 + $0x4] sm:$0xf]
    %v992 = vld [vmem:[#allocation11 + $0x8] sm:$0xf]
    %v993 = vld [vmem:[#allocation11 + $0xc] sm:$0xf]
    %v994 = vld [vmem:[#allocation11 + $0x10] sm:$0xf]
    %v995 = vld [vmem:[#allocation11 + $0x14] sm:$0xf]
    %v996 = vld [vmem:[#allocation11 + $0x18] sm:$0xf]
    %v997 = vld [vmem:[#allocation11 + $0x1c] sm:$0xf]
    %v998 = vld [vmem:[#allocation11 + $0x20] sm:$0xf]
    %v999 = vld [vmem:[#allocation11 + $0x24] sm:$0xf]
    %v1000 = vld [vmem:[#allocation11 + $0x28] sm:$0xf]
    %v1001 = vld [vmem:[#allocation11 + $0x2c] sm:$0xf]
    %v1002 = vld [vmem:[#allocation11 + $0x30] sm:$0xf]
    %v1003 = vld [vmem:[#allocation11 + $0x34] sm:$0xf]
    %v1004 = vld [vmem:[#allocation11 + $0x38] sm:$0xf]
    %v1005 = vld [vmem:[#allocation11 + $0x3c] sm:$0xf]
    %v1006 = vld [vmem:[#allocation11 + $0x40] sm:$0xf]
    %v1007 = vld [vmem:[#allocation11 + $0x44] sm:$0xf]
    %v1008 = vld [vmem:[#allocation11 + $0x48] sm:$0xf]
    %v1009 = vld [vmem:[#allocation11 + $0x4c] sm:$0xf]
    %v1010 = vld [vmem:[#allocation11 + $0x50] sm:$0xf]
    %v1011 = vld [vmem:[#allocation11 + $0x54] sm:$0xf]
    %v1012 = vld [vmem:[#allocation11 + $0x58] sm:$0xf]
    %v1013 = vld [vmem:[#allocation11 + $0x5c] sm:$0xf]
    %v1014 = vld [vmem:[#allocation11 + $0x60] sm:$0xf]
    %v1015 = vld [vmem:[#allocation11 + $0x64] sm:$0xf]
    %v1016 = vld [vmem:[#allocation11 + $0x68] sm:$0xf]
    %v1017 = vld [vmem:[#allocation11 + $0x6c] sm:$0xf]
    %v1018 = vld [vmem:[#allocation11 + $0x70] sm:$0xf]
    %v1019 = vld [vmem:[#allocation11 + $0x74] sm:$0xf]
    %v1020 = vld [vmem:[#allocation11 + $0x78] sm:$0xf]
    %v1021 = vld [vmem:[#allocation11 + $0x7c] sm:$0xf]
    %v1022 = vld [vmem:[#allocation11 + $0x80] sm:$0xf]
    %v1023 = vld [vmem:[#allocation11 + $0x84] sm:$0xf]
    %v1024 = vld [vmem:[#allocation11 + $0x88] sm:$0xf]
    %v1025 = vld [vmem:[#allocation11 + $0x8c] sm:$0xf]
    %v1026 = vld [vmem:[#allocation11 + $0x90] sm:$0xf]
    %v1027 = vld [vmem:[#allocation11 + $0x94] sm:$0xf]
    %v1028 = vld [vmem:[#allocation11 + $0x98] sm:$0xf]
    %v1029 = vld [vmem:[#allocation11 + $0x9c] sm:$0xf]
    %v1030 = vld [vmem:[#allocation11 + $0xa0] sm:$0xf]
    %v1031 = vld [vmem:[#allocation11 + $0xa4] sm:$0xf]
    %v1032 = vld [vmem:[#allocation11 + $0xa8] sm:$0xf]
    %v1033 = vld [vmem:[#allocation11 + $0xac] sm:$0xf]
    %v1034 = vld [vmem:[#allocation11 + $0xb0] sm:$0xf]
    %v1035 = vld [vmem:[#allocation11 + $0xb4] sm:$0xf]
    %v1036 = vld [vmem:[#allocation11 + $0xb8] sm:$0xf]
    %v1037 = vld [vmem:[#allocation11 + $0xbc] sm:$0xf]
    %v1038 = vld [vmem:[%s6 + $0x8] sm:$0x1]
    %v1040 = vlaneseq
    %v1041 = vshrl.u32 %v1040, 7
    %v1042 = vsub.s32 0, %v1041
    %v1043 = vrot.slane %v1038, %v1042
    %v1093 = vunpack.c.l.b16 %v990
    %v1094 = vunpack.c.l.b16 %v991
    %v1095 = vunpack.c.l.b16 %v992
    %v1096 = vunpack.c.l.b16 %v993
    %v1097 = vunpack.c.l.b16 %v994
    %v1098 = vunpack.c.l.b16 %v995
    %v1099 = vunpack.c.l.b16 %v996
    %v1100 = vunpack.c.l.b16 %v997
    %v1101 = vunpack.c.l.b16 %v998
    %v1102 = vunpack.c.l.b16 %v999
    %v1103 = vunpack.c.l.b16 %v1000
    %v1104 = vunpack.c.l.b16 %v1001
    %v1105 = vunpack.c.l.b16 %v1002
    %v1106 = vunpack.c.l.b16 %v1003
    %v1107 = vunpack.c.l.b16 %v1004
    %v1108 = vunpack.c.l.b16 %v1005
    %v1109 = vunpack.c.l.b16 %v1006
    %v1110 = vunpack.c.l.b16 %v1007
    %v1111 = vunpack.c.l.b16 %v1008
    %v1112 = vunpack.c.l.b16 %v1009
    %v1113 = vunpack.c.l.b16 %v1010
    %v1114 = vunpack.c.l.b16 %v1011
    %v1115 = vunpack.c.l.b16 %v1012
    %v1116 = vunpack.c.l.b16 %v1013
    %v1117 = vunpack.c.l.b16 %v1014
    %v1118 = vunpack.c.l.b16 %v1015
    %v1119 = vunpack.c.l.b16 %v1016
    %v1120 = vunpack.c.l.b16 %v1017
    %v1121 = vunpack.c.l.b16 %v1018
    %v1122 = vunpack.c.l.b16 %v1019
    %v1123 = vunpack.c.l.b16 %v1020
    %v1124 = vunpack.c.l.b16 %v1021
    %v1125 = vunpack.c.l.b16 %v1022
    %v1126 = vunpack.c.l.b16 %v1023
    %v1127 = vunpack.c.l.b16 %v1024
    %v1128 = vunpack.c.l.b16 %v1025
    %v1129 = vunpack.c.l.b16 %v1026
    %v1130 = vunpack.c.l.b16 %v1027
    %v1131 = vunpack.c.l.b16 %v1028
    %v1132 = vunpack.c.l.b16 %v1029
    %v1133 = vunpack.c.l.b16 %v1030
    %v1134 = vunpack.c.l.b16 %v1031
    %v1135 = vunpack.c.l.b16 %v1032
    %v1136 = vunpack.c.l.b16 %v1033
    %v1137 = vunpack.c.l.b16 %v1034
    %v1138 = vunpack.c.l.b16 %v1035
    %v1139 = vunpack.c.l.b16 %v1036
    %v1140 = vunpack.c.l.b16 %v1037
    %v1141 = vpack.c.b16 %v1094, %v1093
    %v1142 = vpack.c.b16 %v1096, %v1095
    %v1143 = vpack.c.b16 %v1098, %v1097
    %v1144 = vpack.c.b16 %v1100, %v1099
    %v1145 = vpack.c.b16 %v1102, %v1101
    %v1146 = vpack.c.b16 %v1104, %v1103
    %v1147 = vpack.c.b16 %v1106, %v1105
    %v1148 = vpack.c.b16 %v1108, %v1107
    %v1149 = vpack.c.b16 %v1110, %v1109
    %v1150 = vpack.c.b16 %v1112, %v1111
    %v1151 = vpack.c.b16 %v1114, %v1113
    %v1152 = vpack.c.b16 %v1116, %v1115
    %v1153 = vpack.c.b16 %v1118, %v1117
    %v1154 = vpack.c.b16 %v1120, %v1119
    %v1155 = vpack.c.b16 %v1122, %v1121
    %v1156 = vpack.c.b16 %v1124, %v1123
    %v1157 = vpack.c.b16 %v1126, %v1125
    %v1158 = vpack.c.b16 %v1128, %v1127
    %v1159 = vpack.c.b16 %v1130, %v1129
    %v1160 = vpack.c.b16 %v1132, %v1131
    %v1161 = vpack.c.b16 %v1134, %v1133
    %v1162 = vpack.c.b16 %v1136, %v1135
    %v1163 = vpack.c.b16 %v1138, %v1137
    %v1164 = vpack.c.b16 %v1140, %v1139
    %1189 = vmatprep.subr.bf16.mxu0 0
    %1190 = vmatpush1.bf16.msra.mxu0 %v1141
    %1191 = vmatprep.subr.bf16.mxu0 0
    %1192 = vmatpush1.bf16.msra.mxu0 %v1142
    %1193 = vmatprep.subr.bf16.mxu0 0
    %1194 = vmatpush1.bf16.msra.mxu0 %v1143
    %1195 = vmatprep.subr.bf16.mxu0 0
    %1196 = vmatpush1.bf16.msra.mxu0 %v1144
    %1197 = vmatprep.subr.bf16.mxu0 0
    %1198 = vmatpush1.bf16.msra.mxu0 %v1145
    %1199 = vmatprep.subr.bf16.mxu0 0
    %1200 = vmatpush1.bf16.msra.mxu0 %v1146
    %1201 = vmatprep.subr.bf16.mxu0 0
    %1202 = vmatpush1.bf16.msra.mxu0 %v1147
    %1203 = vmatprep.subr.bf16.mxu0 0
    %1204 = vmatpush1.bf16.msra.mxu0 %v1148
    %1205 = vmatprep.subr.bf16.mxu0 0
    %1206 = vmatpush1.bf16.msra.mxu0 %v1149
    %1207 = vmatprep.subr.bf16.mxu0 0
    %1208 = vmatpush1.bf16.msra.mxu0 %v1150
    %1209 = vmatprep.subr.bf16.mxu0 0
    %1210 = vmatpush1.bf16.msra.mxu0 %v1151
    %1211 = vmatprep.subr.bf16.mxu0 0
    %1212 = vmatpush1.bf16.msra.mxu0 %v1152
    %1213 = vmatprep.subr.bf16.mxu0 0
    %1214 = vmatpush1.bf16.msra.mxu0 %v1153
    %1215 = vmatprep.subr.bf16.mxu0 0
    %1216 = vmatpush1.bf16.msra.mxu0 %v1154
    %1217 = vmatprep.subr.bf16.mxu0 0
    %1218 = vmatpush1.bf16.msra.mxu0 %v1155
    %1219 = vmatprep.subr.bf16.mxu0 0
    %1220 = vmatpush1.bf16.msra.mxu0 %v1156
    %1221 = vmatprep.mubr.bf16.mxu0 %v988
    %1222 = vmatmul.mubr.bf16.gmra.mrb[0].mxu0 %v987
    %v1223 = vpop.f32.mrb[0].mxu0
    %v1224 = vadd.f32 %v1043, %v1223
    %v1225 = vpop.f32.mrb[0].mxu0
    %v1226 = vpop.f32.mrb[0].mxu0
    %v1227 = vpop.f32.mrb[0].mxu0
    %1228 = vdwg.mxu0
    %1229 = vmatprep.subr.bf16.mxu0 0
    %1230 = vmatpush1.bf16.msra.mxu0 %v1157
    %1231 = vmatprep.subr.bf16.mxu0 0
    %1232 = vmatpush1.bf16.msra.mxu0 %v1158
    %1233 = vmatprep.subr.bf16.mxu0 0
    %1234 = vmatpush1.bf16.msra.mxu0 %v1159
    %1235 = vmatprep.subr.bf16.mxu0 0
    %1236 = vmatpush1.bf16.msra.mxu0 %v1160
    %1237 = vmatprep.subr.bf16.mxu0 0
    %1238 = vmatpush1.bf16.msra.mxu0 %v1161
    %1239 = vmatprep.subr.bf16.mxu0 0
    %1240 = vmatpush1.bf16.msra.mxu0 %v1162
    %1241 = vmatprep.subr.bf16.mxu0 0
    %1242 = vmatpush1.bf16.msra.mxu0 %v1163
    %1243 = vmatprep.subr.bf16.mxu0 0
    %1244 = vmatpush1.bf16.msra.mxu0 %v1164
    %1245 = vmatprep.subr.bf16.mxu0 0
    %1246 = vmatpush1.bf16.msra.mxu0 0
    %1247 = vmatprep.subr.bf16.mxu0 0
    %1248 = vmatpush1.bf16.msra.mxu0 0
    %1249 = vmatprep.subr.bf16.mxu0 0
    %1250 = vmatpush1.bf16.msra.mxu0 0
    %1251 = vmatprep.subr.bf16.mxu0 0
    %1252 = vmatpush1.bf16.msra.mxu0 0
    %1253 = vmatprep.subr.bf16.mxu0 0
    %1254 = vmatpush1.bf16.msra.mxu0 0
    %1255 = vmatprep.subr.bf16.mxu0 0
    %1256 = vmatpush1.bf16.msra.mxu0 0
    %1257 = vmatprep.subr.bf16.mxu0 0
    %1258 = vmatpush1.bf16.msra.mxu0 0
    %1259 = vmatprep.subr.bf16.mxu0 0
    %1260 = vmatpush1.bf16.msra.mxu0 0
    %1261 = vmatprep.mubr.bf16.mxu0 0
    %1262 = vmatmul.mubr.bf16.gmra.mrb[0].mxu0 %v989
    %v1263 = vpop.f32.mrb[0].mxu0
    %v1264 = vadd.f32 %v1224, %v1263
    %v1265 = vpop.f32.mrb[0].mxu0
    %v1266 = vpop.f32.mrb[0].mxu0
    %v1267 = vpop.f32.mrb[0].mxu0
    %1268 = vdwg.mxu0
    %v1269 = vpack.c.bf16 %v1264, %v1264
    %1270 = vst [vmem:[#allocation13] sm:$0xf] %v1269
    // Predicated region
    $region54: #{tpu_custom_call.1} parent=1 // pred_check
      _
    $region55: #{tpu_custom_call.1} parent=1 // pred_check_branch
      %1272 = sbr.rel (0) target = $region57
    $region56: #{tpu_custom_call.1} parent=1 // pred_region
      %s1274 = ssub.s32 64, 64
      %1275 = vsyncadd [#allocation4], %s1274
      %s1277 = sshll.u32 [#allocation13], 4
      %s1278 = int_to_ptr.vmem [resolvable:$true] %s1277
      %1280 = dma.vmem_to_hbm [thread:$0]  %s1278, 64, %s7, [#allocation4]
    $region57: #{tpu_custom_call.1} parent=1 // pred_fallthru
      _
    // Predicated region
    $region58: #{tpu_custom_call.1} parent=1 // pred_check
      _
    $region59: #{tpu_custom_call.1} parent=1 // pred_check_branch
      %1282 = sbr.rel (0) target = $region61
    $region60: #{tpu_custom_call.1} parent=1 // pred_region
      %1283 = dma.done [#allocation4], 64
    $region61: #{tpu_custom_call.1} parent=1 // pred_fallthru
      _
    %1284 = vsyncpa [#allocation3], 1
    %1285 = vsyncpa [#allocation6], 1
    %1286 = vsyncpa [#allocation9], 1
    %1287 = vsyncpa [#allocation12], 1
    %1288 = vsyncpa [#allocation4], 1

</llo_original>
